<compile_context>
chip_gen: v7x
topology: tpu7x:2x2x1
jax: 0.10.0
libtpu: 0.0.40
codegen_flags: <defaults>
</compile_context>

<pallas_src>
from functools import partial

import jax
import jax.numpy as jnp
from jax.experimental import pallas as pl
from jax.experimental.pallas import tpu as pltpu

# ---- config (synthetic, stands in for cfg.MODEL.*) ----
NUM_CLASSES = 8
CLS_AGNOSTIC_BBOX_REG = False
DIM_IN = 32
N_ROIS = 8


def _round_up(a, b):
    return ((a + b - 1) // b) * b


def _fast_rcnn_fused_kernel(n_cls, x_ref, w_ref, b_ref, out_ref):
    # x_ref: (TILE_N, dim_in) bf16, w_ref: (dim_in, C_pad) bf16,
    # b_ref: (1, C_pad) f32,   out_ref: (TILE_N, C_pad) f32
    z = jnp.dot(x_ref[...], w_ref[...],
                preferred_element_type=jnp.float32) + b_ref[...]

    # Softmax over the first n_cls columns only (masked within the fused slab);
    # the remaining columns (bbox preds + zero padding) pass through untouched.
    col = jax.lax.broadcasted_iota(jnp.int32, z.shape, 1)
    is_cls = col < n_cls
    logits = jnp.where(is_cls, z, jnp.float32(-1e30))
    m = jnp.max(logits, axis=-1, keepdims=True)
    e = jnp.exp(logits - m)                      # 0 outside the cls columns
    denom = jnp.sum(e, axis=-1, keepdims=True)
    probs = e * pl.reciprocal(denom, approx=True)   # EUP slot, ~free

    out_ref[...] = jnp.where(is_cls, probs, z)


def prepare_fused_params(cls_w, cls_b, bbox_w, bbox_b, lane_pad=128):
    """Hoisted, call once at init: transpose + concat + pad + bf16-cast weights."""
    n_cls, dim_in = cls_w.shape
    n_box = bbox_w.shape[0]
    c = n_cls + n_box
    c_pad = _round_up(c, lane_pad)

    w = jnp.concatenate([cls_w.T, bbox_w.T], axis=1)          # (dim_in, c)
    w = jnp.pad(w, ((0, 0), (0, c_pad - c)))                  # lane-dense slab
    b = jnp.concatenate([cls_b, bbox_b], axis=0)
    b = jnp.pad(b, (0, c_pad - c)).reshape(1, c_pad)
    return w.astype(jnp.bfloat16), b.astype(jnp.float32), n_cls, n_box


@partial(jax.jit, static_argnames=("n_cls", "n_box", "tile_n"))
def fast_rcnn_class_outputs_forward(x, w_fused, b_fused, *, n_cls, n_box,
                                    tile_n=256):
    """x: (N, dim_in) or (N, dim_in, 1, 1). w_fused/b_fused from prepare_fused_params."""
    if x.ndim == 4:
        x = x.reshape(x.shape[0], x.shape[1])        # squeeze(3).squeeze(2)

    n, dim_in = x.shape
    c_pad = w_fused.shape[1]

    # Row tile: multiple of 8 sublanes, shrink for tiny inputs.
    tile_n = min(tile_n, _round_up(n, 8))
    n_pad = _round_up(n, tile_n)
    if n_pad != n:
        x = jnp.pad(x, ((0, n_pad - n), (0, 0)))
    x = x.astype(jnp.bfloat16)                        # halve activation DMA bytes

    grid = (n_pad // tile_n,)
    fused_out = pl.pallas_call(
        partial(_fast_rcnn_fused_kernel, n_cls),
        out_shape=jax.ShapeDtypeStruct((n_pad, c_pad), jnp.float32),
        grid_spec=pltpu.PrefetchScalarGridSpec(
            num_scalar_prefetch=0,
            grid=grid,
            in_specs=[
                pl.BlockSpec((tile_n, dim_in), lambda i: (i, 0)),   # x rows tiled
                pl.BlockSpec((dim_in, c_pad), lambda i: (0, 0)),    # fused weight
                pl.BlockSpec((1, c_pad), lambda i: (0, 0)),         # fused bias
            ],
            out_specs=pl.BlockSpec((tile_n, c_pad), lambda i: (i, 0)),
        ),
        compiler_params=pltpu.CompilerParams(
            dimension_semantics=("parallel",),       # v7x: shard rows over 2 TCs
            vmem_limit_bytes=64 << 20,
        ),
    )(x, w_fused, b_fused)

    cls_score = fused_out[:n, :n_cls]
    bbox_pred = fused_out[:n, n_cls:n_cls + n_box]
    return cls_score, bbox_pred


def init_params(key, dim_in, num_classes, cls_agnostic):
    k1, k2 = jax.random.split(key)
    bbox_out = 4 * 2 if cls_agnostic else 4 * num_classes
    cls_w = 0.01 * jax.random.normal(k1, (num_classes, dim_in), jnp.float32)
    cls_b = jnp.zeros((num_classes,), jnp.float32)
    bbox_w = 0.001 * jax.random.normal(k2, (bbox_out, dim_in), jnp.float32)
    bbox_b = jnp.zeros((bbox_out,), jnp.float32)
    return cls_w, cls_b, bbox_w, bbox_b


if __name__ == "__main__":
    key = jax.random.PRNGKey(0)
    kx, kp = jax.random.split(key)

    # RoI-pooled features typically arrive as (N, dim_in, 1, 1)
    x = jax.random.normal(kx, (N_ROIS, DIM_IN, 1, 1), jnp.float32)
    cls_w, cls_b, bbox_w, bbox_b = init_params(
        kp, DIM_IN, NUM_CLASSES, CLS_AGNOSTIC_BBOX_REG)

    # One-time weight prep (hoisted out of the forward path).
    w_fused, b_fused, n_cls, n_box = prepare_fused_params(
        cls_w, cls_b, bbox_w, bbox_b)

    cls_score, bbox_pred = fast_rcnn_class_outputs_forward(
        x, w_fused, b_fused, n_cls=n_cls, n_box=n_box)
    jax.block_until_ready((cls_score, bbox_pred))

    # Sanity check against a plain-JAX reference using the same bf16 operand
    # precision (f32 accumulation). Slightly loose tolerance on cls because of
    # the approx EUP reciprocal in the softmax denominator.
    x2 = x.reshape(N_ROIS, DIM_IN)
    x_b = x2.astype(jnp.bfloat16).astype(jnp.float32)
    wc_b = cls_w.astype(jnp.bfloat16).astype(jnp.float32)
    wb_b = bbox_w.astype(jnp.bfloat16).astype(jnp.float32)
    ref_cls = jax.nn.softmax(x_b @ wc_b.T + cls_b, axis=1)
    ref_bbox = x_b @ wb_b.T + bbox_b
    assert cls_score.shape == (N_ROIS, NUM_CLASSES)
    assert bbox_pred.shape == (N_ROIS, 4 * NUM_CLASSES)
    assert jnp.allclose(cls_score, ref_cls, atol=1e-3, rtol=1e-3)
    assert jnp.allclose(bbox_pred, ref_bbox, atol=1e-4, rtol=1e-4)

    print("KERNEL_OK")
</pallas_src>

<mosaic_0001>
module attributes {stable_mosaic.version = 11 : i64} {
  func.func @_fast_rcnn_fused_kernel(%arg0: i32, %arg1: memref<8x32xbf16, #tpu.memory_space<vmem>>, %arg2: memref<32x128xbf16, #tpu.memory_space<vmem>>, %arg3: memref<1x128xf32, #tpu.memory_space<vmem>>, %arg4: memref<8x128xf32, #tpu.memory_space<vmem>>) attributes {dimension_semantics = [#tpu.dimension_semantics<parallel>], iteration_bounds = array<i64: 1>, scalar_prefetch = 0 : i64, scratch_operands = 0 : i64, tpu.core_type = #tpu.core_type<tc>, window_params = [{transform_indices = @transform_0, window_bounds = array<i64: 8, 32>}, {pipeline_mode = #tpu.pipeline_mode<synchronous>, transform_indices = @transform_1, window_bounds = array<i64: 32, 128>}, {pipeline_mode = #tpu.pipeline_mode<synchronous>, transform_indices = @transform_2, window_bounds = array<i64: 1, 128>}, {transform_indices = @transform_3, window_bounds = array<i64: 8, 128>}]} {
    %c0 = arith.constant 0 : index
    %c0_0 = arith.constant 0 : index
    %0 = vector.load %arg1[%c0, %c0_0] : memref<8x32xbf16, #tpu.memory_space<vmem>>, vector<8x32xbf16>
    %c0_1 = arith.constant 0 : index
    %c0_2 = arith.constant 0 : index
    %1 = vector.load %arg2[%c0_1, %c0_2] : memref<32x128xbf16, #tpu.memory_space<vmem>>, vector<32x128xbf16>
    %cst = arith.constant dense<0.000000e+00> : vector<8x128xf32>
    %2 = tpu.matmul %0, %1, %cst {dimension_numbers = #tpu.dot_dimension_numbers<[1], [0], [0], [1], [0, 0, 1, 1], [], []>} : vector<8x32xbf16>, vector<32x128xbf16>, vector<8x128xf32> -> vector<8x128xf32>
    %c0_3 = arith.constant 0 : index
    %c0_4 = arith.constant 0 : index
    %3 = vector.load %arg3[%c0_3, %c0_4] : memref<1x128xf32, #tpu.memory_space<vmem>>, vector<1x128xf32>
    %4 = vector.broadcast %3 : vector<1x128xf32> to vector<8x128xf32>
    %5 = arith.addf %2, %4 : vector<8x128xf32>
    %6 = tpu.iota {dimensions = array<i32: 1>} : vector<8x128xi32>
    %c8_i32 = arith.constant 8 : i32
    %7 = vector.broadcast %c8_i32 : i32 to vector<8x128xi32>
    %8 = arith.cmpi slt, %6, %7 : vector<8x128xi32>
    %cst_5 = arith.constant -1.000000e+30 : f32
    %9 = vector.broadcast %cst_5 : f32 to vector<8x128xf32>
    %10 = arith.select %8, %5, %9 : vector<8x128xi1>, vector<8x128xf32>
    %cst_6 = arith.constant dense<0xFF800000> : vector<8xf32>
    %11 = vector.multi_reduction <maximumf>, %10, %cst_6 [1] : vector<8x128xf32> to vector<8xf32>
    %12 = vector.shape_cast %11 : vector<8xf32> to vector<8x1xf32>
    %13 = vector.broadcast %12 : vector<8x1xf32> to vector<8x128xf32>
    %14 = arith.subf %10, %13 : vector<8x128xf32>
    %15 = math.exp %14 : vector<8x128xf32>
    %cst_7 = arith.constant dense<0.000000e+00> : vector<8xf32>
    %16 = vector.multi_reduction <add>, %15, %cst_7 [1] : vector<8x128xf32> to vector<8xf32>
    %17 = vector.shape_cast %16 : vector<8xf32> to vector<8x1xf32>
    %18 = tpu.reciprocal %17 {approx = true} : vector<8x1xf32> -> vector<8x1xf32>
    %19 = vector.broadcast %18 : vector<8x1xf32> to vector<8x128xf32>
    %20 = arith.mulf %15, %19 : vector<8x128xf32>
    %21 = arith.select %8, %20, %5 : vector<8x128xi1>, vector<8x128xf32>
    %c0_8 = arith.constant 0 : index
    %c0_9 = arith.constant 0 : index
    %22 = vector.load %arg4[%c0_8, %c0_9] : memref<8x128xf32, #tpu.memory_space<vmem>>, vector<8x128xf32>
    tpu.vector_store %arg4[%c0_8, %c0_9], %21 {strides = array<i32>} : memref<8x128xf32, #tpu.memory_space<vmem>>, vector<8x128xf32>,
    return
  }
  func.func @transform_0(%arg0: i32) -> (i32, i32) {
    %c0_i32 = arith.constant 0 : i32
    %c0_i32_0 = arith.constant 0 : i32
    return %arg0, %c0_i32 : i32, i32
  }
  func.func @transform_1(%arg0: i32) -> (i32, i32) {
    %c0_i32 = arith.constant 0 : i32
    %c0_i32_0 = arith.constant 0 : i32
    %c0_i32_1 = arith.constant 0 : i32
    return %c0_i32, %c0_i32_0 : i32, i32
  }
  func.func @transform_2(%arg0: i32) -> (i32, i32) {
    %c0_i32 = arith.constant 0 : i32
    %c0_i32_0 = arith.constant 0 : i32
    %c0_i32_1 = arith.constant 0 : i32
    return %c0_i32, %c0_i32_0 : i32, i32
  }
  func.func @transform_3(%arg0: i32) -> (i32, i32) {
    %c0_i32 = arith.constant 0 : i32
    %c0_i32_0 = arith.constant 0 : i32
    return %arg0, %c0_i32 : i32, i32
  }
}

</mosaic_0001>

<llo_original>
// kernel: fast_rcnn_class_outputs_forward.1
$region0: #{fast_rcnn_class_outputs_forward.1}
  #allocation0 [shape = 'u32[]', space=smem, size = 0x4, offset = 0x4, fixed_abs, tag = 'smem constant byte address 0x4 - core index']
  #allocation1 [shape = 'u32[144,128]{1,0:T(1,128)}', space=vmem, size = 0x12000, scoped, tag = 'internal scratch']
  %s0 = inlined_call_operand.hbm [shape: bf16[8,32], index: 0, kind: input, shape index: {}]
  %s1 = inlined_call_operand.hbm [shape: bf16[32,128], index: 1, kind: input, shape index: {}]
  %s2 = inlined_call_operand.hbm [shape: f32[1,128], index: 2, kind: input, shape index: {}]
  %s3 = inlined_call_operand.hbm [shape: f32[8,128], index: 3, kind: output, shape index: {}]
  %s4 = sld [smem:[#allocation0]]
  $region34: #{fast_rcnn_class_outputs_forward.1} parent=0
    _
  %s6 = ssub.s32 1, %s4
  %s7 = scalar_select 0, %s6, %s4
  $region1: #{fast_rcnn_class_outputs_forward.1} parent=0
    #allocation2 [shape = 'u8[2048]{0}', space=vmem, size = 0x800, scoped, tag = 'input window, operand 0, single buffered']
    #allocation3 [shape = 's32[1]{0}', space=sflag, size = 0x4, scoped, tag = 'scoped memory for fast_rcnn_class_outputs_forward.1']
    #allocation4 [shape = 's32[1]{0}', space=sflag, size = 0x4, scoped, tag = 'scoped memory for fast_rcnn_class_outputs_forward.1']
    #allocation5 [shape = 'u8[8192]{0}', space=vmem, size = 0x2000, scoped, tag = 'input window, operand 1, single buffered']
    #allocation6 [shape = 's32[1]{0}', space=sflag, size = 0x4, scoped, tag = 'scoped memory for fast_rcnn_class_outputs_forward.1']
    #allocation7 [shape = 'u8[512]{0}', space=vmem, size = 0x400, scoped, tag = 'input window, operand 2, single buffered']
    #allocation8 [shape = 'u8[4096]{0}', space=vmem, size = 0x1000, scoped, tag = 'output window, operand 0, single buffered']
    %8 = vsyncpa [#allocation3], 0
    %9 = vsyncpa [#allocation6], 0
    %10 = vsyncpa [#allocation4], 0
    // Predicated region
    $region2: #{fast_rcnn_class_outputs_forward.1} parent=1 // pred_check
      _
    $region3: #{fast_rcnn_class_outputs_forward.1} parent=1 // pred_check_branch
      %12 = sbr.rel (0) target = $region5
    $region4: #{fast_rcnn_class_outputs_forward.1} parent=1 // pred_region
      %s14 = ssub.s32 64, 64
      %15 = vsyncadd [#allocation3], %s14
      %s17 = sshll.u32 [#allocation2], 4
      %s18 = int_to_ptr.vmem [resolvable:$true] %s17
      %20 = dma.hbm_to_vmem [thread:$0]  %s0, 64, %s18, [#allocation3]
    $region5: #{fast_rcnn_class_outputs_forward.1} parent=1 // pred_fallthru
      _
    // Predicated region
    $region6: #{fast_rcnn_class_outputs_forward.1} parent=1 // pred_check
      _
    $region7: #{fast_rcnn_class_outputs_forward.1} parent=1 // pred_check_branch
      %22 = sbr.rel (0) target = $region9
    $region8: #{fast_rcnn_class_outputs_forward.1} parent=1 // pred_region
      %s24 = ssub.s32 256, 256
      %25 = vsyncadd [#allocation6], %s24
      %s26 = sshll.u32 [#allocation5], 4
      %s27 = int_to_ptr.vmem [resolvable:$true] %s26
      %32 = dma.hbm_to_vmem [thread:$0]  %s1, 256, %s27, [#allocation6], 64, 64, 4
    $region9: #{fast_rcnn_class_outputs_forward.1} parent=1 // pred_fallthru
      _
    // Predicated region
    $region10: #{fast_rcnn_class_outputs_forward.1} parent=1 // pred_check
      _
    $region11: #{fast_rcnn_class_outputs_forward.1} parent=1 // pred_check_branch
      %34 = sbr.rel (0) target = $region13
    $region12: #{fast_rcnn_class_outputs_forward.1} parent=1 // pred_region
      %s36 = ssub.s32 16, 16
      %37 = vsyncadd [#allocation6], %s36
      %s39 = sshll.u32 [#allocation7], 4
      %s40 = int_to_ptr.vmem [resolvable:$true] %s39
      %42 = dma.hbm_to_vmem [thread:$0]  %s2, 16, %s40, [#allocation6]
    $region13: #{fast_rcnn_class_outputs_forward.1} parent=1 // pred_fallthru
      _
    // Predicated region
    $region14: #{fast_rcnn_class_outputs_forward.1} parent=1 // pred_check
      _
    $region15: #{fast_rcnn_class_outputs_forward.1} parent=1 // pred_check_branch
      %44 = sbr.rel (0) target = $region17
    $region16: #{fast_rcnn_class_outputs_forward.1} parent=1 // pred_region
      %45 = dma.done [#allocation3], 64
    $region17: #{fast_rcnn_class_outputs_forward.1} parent=1 // pred_fallthru
      _
    // Predicated region
    $region18: #{fast_rcnn_class_outputs_forward.1} parent=1 // pred_check
      _
    $region19: #{fast_rcnn_class_outputs_forward.1} parent=1 // pred_check_branch
      %47 = sbr.rel (0) target = $region21
    $region20: #{fast_rcnn_class_outputs_forward.1} parent=1 // pred_region
      %48 = dma.done [#allocation6], 256
    $region21: #{fast_rcnn_class_outputs_forward.1} parent=1 // pred_fallthru
      _
    // Predicated region
    $region22: #{fast_rcnn_class_outputs_forward.1} parent=1 // pred_check
      _
    $region23: #{fast_rcnn_class_outputs_forward.1} parent=1 // pred_check_branch
      %50 = sbr.rel (0) target = $region25
    $region24: #{fast_rcnn_class_outputs_forward.1} parent=1 // pred_region
      %51 = dma.done [#allocation6], 16
    $region25: #{fast_rcnn_class_outputs_forward.1} parent=1 // pred_fallthru
      _
    %v53 = vld [vmem:[#allocation2] sm:$0xf]
    %v54 = vld [vmem:[#allocation5] sm:$0xf]
    %v55 = vld [vmem:[#allocation5 + $0x4] sm:$0xf]
    %v56 = vld [vmem:[#allocation5 + $0x8] sm:$0xf]
    %v57 = vld [vmem:[#allocation5 + $0xc] sm:$0xf]
    %v58 = vld [vmem:[#allocation7] sm:$0x1]
    %v60 = vlaneseq
    %v61 = vshrl.u32 %v60, 7
    %v62 = vsub.s32 0, %v61
    %v63 = vrot.slane %v58, %v62
    %v69 = vunpack.c.l.b16 %v54
    %v70 = vunpack.c.l.b16 %v55
    %v71 = vunpack.c.l.b16 %v56
    %v72 = vunpack.c.l.b16 %v57
    %v73 = vpack.c.b16 %v70, %v69
    %v74 = vpack.c.b16 %v72, %v71
    %vm77 = vcmask 261120
    %v79 = vsel %vm77, %v53, 0
    %81 = vmatprep.subr.bf16.mxu0 0
    %82 = vmatpush1.bf16.msra.mxu0 %v73
    %83 = vmatprep.subr.bf16.mxu0 0
    %84 = vmatpush1.bf16.msra.mxu0 %v74
    %85 = vmatprep.subr.bf16.mxu0 0
    %86 = vmatpush1.bf16.msra.mxu0 0
    %87 = vmatprep.subr.bf16.mxu0 0
    %88 = vmatpush1.bf16.msra.mxu0 0
    %89 = vmatprep.subr.bf16.mxu0 0
    %90 = vmatpush1.bf16.msra.mxu0 0
    %91 = vmatprep.subr.bf16.mxu0 0
    %92 = vmatpush1.bf16.msra.mxu0 0
    %93 = vmatprep.subr.bf16.mxu0 0
    %94 = vmatpush1.bf16.msra.mxu0 0
    %95 = vmatprep.subr.bf16.mxu0 0
    %96 = vmatpush1.bf16.msra.mxu0 0
    %97 = vmatprep.subr.bf16.mxu0 0
    %98 = vmatpush1.bf16.msra.mxu0 0
    %99 = vmatprep.subr.bf16.mxu0 0
    %100 = vmatpush1.bf16.msra.mxu0 0
    %101 = vmatprep.subr.bf16.mxu0 0
    %102 = vmatpush1.bf16.msra.mxu0 0
    %103 = vmatprep.subr.bf16.mxu0 0
    %104 = vmatpush1.bf16.msra.mxu0 0
    %105 = vmatprep.subr.bf16.mxu0 0
    %106 = vmatpush1.bf16.msra.mxu0 0
    %107 = vmatprep.subr.bf16.mxu0 0
    %108 = vmatpush1.bf16.msra.mxu0 0
    %109 = vmatprep.subr.bf16.mxu0 0
    %110 = vmatpush1.bf16.msra.mxu0 0
    %111 = vmatprep.subr.bf16.mxu0 0
    %112 = vmatpush1.bf16.msra.mxu0 0
    %113 = vmatprep.mubr.bf16.mxu0 0
    %114 = vmatmul.mubr.bf16.gmra.mrb[0].mxu0 %v79
    %v115 = vpop.f32.mrb[0].mxu0
    %v116 = vadd.f32 %v63, %v115
    %v117 = vpop.f32.mrb[0].mxu0
    %v118 = vpop.f32.mrb[0].mxu0
    %v119 = vpop.f32.mrb[0].mxu0
    %120 = vdwg.mxu0
    %v121 = vlaneseq
    %v122 = vand.u32 %v121, 127
    %vm123 = vcmp.lt.s32.totalorder %v122, 8
    %v124 = vsel %vm123, %v116, -1e+30
    %125 = vmax.xlane.f32.xlu0 %v124
    %v126 = vpop.xlane.xlu0 %125
    %v127 = vsub.f32 %v124, %v126
    %v128 = vmul.f32 %v127, 1.442695
    %v129 = vpow.pop %v128
    %130 = vadd.xlane.f32.xlu0 %v129
    %v131 = vpop.xlane.xlu0 %130
    %v132 = vrcp.pop %v131
    %v133 = vmul.f32 %v129, %v132
    %v134 = vsel %vm123, %v133, %v116
    %135 = vst [vmem:[#allocation8] sm:$0xff] %v134
    // Predicated region
    $region26: #{fast_rcnn_class_outputs_forward.1} parent=1 // pred_check
      _
    $region27: #{fast_rcnn_class_outputs_forward.1} parent=1 // pred_check_branch
      %137 = sbr.rel (0) target = $region29
    $region28: #{fast_rcnn_class_outputs_forward.1} parent=1 // pred_region
      %s139 = ssub.s32 128, 128
      %140 = vsyncadd [#allocation4], %s139
      %s142 = sshll.u32 [#allocation8], 4
      %s143 = int_to_ptr.vmem [resolvable:$true] %s142
      %145 = dma.vmem_to_hbm [thread:$0]  %s143, 128, %s3, [#allocation4]
    $region29: #{fast_rcnn_class_outputs_forward.1} parent=1 // pred_fallthru
      _
    // Predicated region
    $region30: #{fast_rcnn_class_outputs_forward.1} parent=1 // pred_check
      _
    $region31: #{fast_rcnn_class_outputs_forward.1} parent=1 // pred_check_branch
      %147 = sbr.rel (0) target = $region33
    $region32: #{fast_rcnn_class_outputs_forward.1} parent=1 // pred_region
      %148 = dma.done [#allocation4], 128
    $region33: #{fast_rcnn_class_outputs_forward.1} parent=1 // pred_fallthru
      _
    %149 = vsyncpa [#allocation3], 1
    %150 = vsyncpa [#allocation6], 1
    %151 = vsyncpa [#allocation4], 1

</llo_original>
